<compile_context>
chip_gen: v7x
topology: tpu7x:2x2x1
jax: 0.10.0
libtpu: 0.0.40
codegen_flags: <defaults>
</compile_context>

<pallas_src>
import jax
import jax.numpy as jnp
from jax.experimental import pallas as pl
from jax.experimental.pallas import tpu as pltpu


def _round_up(x: int, m: int) -> int:
    return ((x + m - 1) // m) * m


def _device_kind() -> str:
    try:
        return jax.devices()[0].device_kind.lower()
    except Exception:
        return ""


def _is_v7x() -> bool:
    kind = _device_kind()
    return ("v7" in kind) or ("7x" in kind)


def _default_block_cols() -> int:
    """Per-generation reduction-tile default (sized against the HBM roofline)."""
    kind = _device_kind()
    if ("v7" in kind) or ("7x" in kind):
        return 8192   # ~3.2 TB/s/TC: 8 MiB blocks hide the ~0.35 us/step overhead
    if "v6" in kind:
        return 8192   # ~1.4 TB/s: 8 MiB blocks ~94% roofline, fits 32 MiB scoped VMEM
    if "v5" in kind:
        return 4096   # 16 MiB scoped-VMEM default: 4 MiB blocks (8 MiB double-buffered)
    return 2048       # conservative fallback


def _make_mean_pool_kernel(hw: int, tk: int, needs_mask: bool, lane_wide: bool):
    inv_hw = 1.0 / float(hw)
    n_chunks = tk // 128 if lane_wide else 1

    def _accumulate(x_ref, acc_ref, k, masked):
        if lane_wide:
            # Pure VPU adds of lane-aligned 128-wide chunks into a (tm, 128)
            # accumulator; no cross-lane work in the hot loop.
            acc = acc_ref[...]
            base = k * tk
            for c in range(n_chunks):
                xc = x_ref[:, c * 128:(c + 1) * 128].astype(jnp.float32)
                if masked:
                    col = (jax.lax.broadcasted_iota(jnp.int32, xc.shape, 1)
                           + (base + c * 128))
                    xc = jnp.where(col < hw, xc, 0.0)
                acc = acc + xc
            acc_ref[...] = acc
        else:
            # Fallback (single block, hw not a multiple of 128).
            x = x_ref[...].astype(jnp.float32)
            if masked:
                col = jax.lax.broadcasted_iota(jnp.int32, x.shape, 1) + k * tk
                x = jnp.where(col < hw, x, 0.0)
            acc_ref[...] += jnp.sum(x, axis=-1, keepdims=True)

    def _finalize(o_ref, acc_ref):
        acc = acc_ref[...]
        if lane_wide:
            # Single cross-lane (XLU) reduce, once per output tile.
            total = jnp.sum(acc, axis=-1, keepdims=True)
        else:
            total = acc
        o_ref[...] = (total * inv_hw).astype(o_ref.dtype)

    def kernel(x_ref, o_ref, acc_ref):
        k = pl.program_id(1)
        nk = pl.num_programs(1)

        @pl.when(k == 0)
        def _init():
            acc_ref[...] = jnp.zeros_like(acc_ref)

        if needs_mask:
            # Hot path: all full blocks, zero masking ops.
            @pl.when(k < nk - 1)
            def _full():
                _accumulate(x_ref, acc_ref, k, masked=False)

            # Cold path: last (partial) block only — mask + finalize.
            @pl.when(k == nk - 1)
            def _last():
                _accumulate(x_ref, acc_ref, k, masked=True)
                _finalize(o_ref, acc_ref)
        else:
            _accumulate(x_ref, acc_ref, k, masked=False)

            @pl.when(k == nk - 1)
            def _done():
                _finalize(o_ref, acc_ref)

    return kernel


def global_mean_pool_2d(x: jax.Array, *, block_rows: int = 256,
                        block_cols: int | None = None) -> jax.Array:
    """Equivalent of MyGlobal2DMaxPoolLayer.forward: mean over the last two dims."""
    *lead, H, W = x.shape
    rows = 1
    for d in lead:
        rows *= d
    hw = H * W

    if block_cols is None:
        block_cols = _default_block_cols()
    if block_rows % 8 != 0:
        raise ValueError("block_rows must be a multiple of 8")
    if block_cols % 128 != 0:
        raise ValueError("block_cols must be a multiple of 128")

    # Lane-dense 2D view of the contiguous tensor (free reshape).
    x2 = x.reshape(rows, hw)

    # Row tiling.  On v7x (2 TensorCores) cap tm so the 'parallel' row axis has
    # at least 2 blocks and the second core is not idle for small batches.
    tm = min(block_rows, rows)
    if _is_v7x() and rows > 8:
        tm = min(tm, max(8, _round_up(-(-rows // 2), 8)))

    # Reduction tiling: one full-width block when it fits, otherwise
    # 128-lane-aligned blocks with an exact tail mask on the last block only.
    tk = hw if hw <= block_cols else block_cols
    lane_wide = (tk % 128 == 0)
    needs_mask = (hw % tk) != 0
    acc_width = 128 if lane_wide else 1
    # TODO(synk): for H*W < 128 a lane-packing / MXU segmented-sum path (fold rows
    # into the lane dim, matmul against a block-diagonal ones matrix) would keep
    # the DMA lane-dense; current path is correct but under-uses lanes there.

    grid = (pl.cdiv(rows, tm), pl.cdiv(hw, tk))

    itemsize = jnp.dtype(x.dtype).itemsize
    # Explicit VMEM budget: double-buffered input block + accumulator + output,
    # so the big v6e/v7x tiles don't trip the scoped-VMEM default.
    vmem_needed = (2 * tm * tk * itemsize       # double-buffered input blocks
                   + tm * acc_width * 4         # f32 accumulator scratch
                   + 2 * tm * itemsize          # output block (double-buffered)
                   + (2 << 20))                 # headroom
    vmem_limit = int(max(vmem_needed, 16 << 20))

    out = pl.pallas_call(
        _make_mean_pool_kernel(hw, tk, needs_mask, lane_wide),
        out_shape=jax.ShapeDtypeStruct((rows, 1), x.dtype),
        grid=grid,
        in_specs=[pl.BlockSpec((tm, tk), lambda i, k: (i, k))],
        out_specs=pl.BlockSpec((tm, 1), lambda i, k: (i, 0)),
        scratch_shapes=[pltpu.VMEM((tm, acc_width), jnp.float32)],
        compiler_params=pltpu.CompilerParams(
            dimension_semantics=("parallel", "arbitrary"),
            vmem_limit_bytes=vmem_limit,
        ),
        cost_estimate=pl.CostEstimate(
            flops=rows * hw,
            transcendentals=0,
            bytes_accessed=rows * hw * itemsize + rows * itemsize,
        ),
    )(x2)

    return out.reshape(tuple(lead))


if __name__ == "__main__":
    key = jax.random.PRNGKey(0)

    # Case 1: NCHW feature map, hw multiple of 128 (lane-wide path, single k block).
    B, C, H, W = 2, 4, 16, 16
    x = jax.random.normal(key, (B, C, H, W), dtype=jnp.float32)
    out = jax.block_until_ready(global_mean_pool_2d(x))
    ref = jnp.mean(x, axis=(-2, -1))
    assert out.shape == (B, C)
    assert jnp.allclose(out, ref, atol=1e-5, rtol=1e-5)

    # Case 2: exercises row tiling (+padded row tail), multiple reduction blocks,
    # and the hoisted tail-mask path (hw=324, tk=128).
    key2 = jax.random.PRNGKey(1)
    x2 = jax.random.normal(key2, (3, 4, 18, 18), dtype=jnp.float32)
    out2 = jax.block_until_ready(
        global_mean_pool_2d(x2, block_rows=8, block_cols=128))
    ref2 = jnp.mean(x2, axis=(-2, -1))
    assert out2.shape == (3, 4)
    assert jnp.allclose(out2, ref2, atol=1e-5, rtol=1e-5)

    # Case 3: tiny spatial size (hw=49 < 128) -> full-width single-block fallback.
    key3 = jax.random.PRNGKey(2)
    x3 = jax.random.normal(key3, (2, 3, 7, 7), dtype=jnp.float32)
    out3 = jax.block_until_ready(global_mean_pool_2d(x3))
    ref3 = jnp.mean(x3, axis=(-2, -1))
    assert out3.shape == (2, 3)
    assert jnp.allclose(out3, ref3, atol=1e-5, rtol=1e-5)

    print("KERNEL_OK")
</pallas_src>

<mosaic_0001>
module attributes {stable_mosaic.version = 11 : i64} {
  func.func @kernel(%arg0: i32, %arg1: i32, %arg2: memref<8x256xf32, #tpu.memory_space<vmem>>, %arg3: memref<8x1xf32, #tpu.memory_space<vmem>>, %arg4: memref<8x128xf32, #tpu.memory_space<vmem>>) attributes {dimension_semantics = [#tpu.dimension_semantics<parallel>, #tpu.dimension_semantics<arbitrary>], iteration_bounds = array<i64: 1, 1>, scalar_prefetch = 0 : i64, scratch_operands = 1 : i64, tpu.core_type = #tpu.core_type<tc>, window_params = [{transform_indices = @transform_0, window_bounds = array<i64: 8, 256>}, {transform_indices = @transform_1, window_bounds = array<i64: 8, 1>}]} {
    %c0_i32 = arith.constant 0 : i32
    %0 = arith.cmpi eq, %arg1, %c0_i32 : i32
    %1 = arith.extui %0 : i1 to i32
    %c0_i32_0 = arith.constant 0 : i32
    %2 = arith.cmpi ne, %1, %c0_i32_0 : i32
    scf.if %2 {
      %cst = arith.constant 0.000000e+00 : f32
      %12 = vector.broadcast %cst : f32 to vector<8x128xf32>
      %c0_9 = arith.constant 0 : index
      %c0_10 = arith.constant 0 : index
      %13 = vector.load %arg4[%c0_9, %c0_10] : memref<8x128xf32, #tpu.memory_space<vmem>>, vector<8x128xf32>
      tpu.vector_store %arg4[%c0_9, %c0_10], %12 {strides = array<i32>} : memref<8x128xf32, #tpu.memory_space<vmem>>, vector<8x128xf32>,
    } else {
    }
    %c0 = arith.constant 0 : index
    %c0_1 = arith.constant 0 : index
    %3 = vector.load %arg4[%c0, %c0_1] : memref<8x128xf32, #tpu.memory_space<vmem>>, vector<8x128xf32>
    %c0_2 = arith.constant 0 : index
    %c0_3 = arith.constant 0 : index
    %4 = vector.load %arg2[%c0_2, %c0_3] : memref<8x256xf32, #tpu.memory_space<vmem>>, vector<8x128xf32>
    %5 = arith.addf %3, %4 : vector<8x128xf32>
    %c0_4 = arith.constant 0 : index
    %c128 = arith.constant 128 : index
    %6 = vector.load %arg2[%c0_4, %c128] : memref<8x256xf32, #tpu.memory_space<vmem>>, vector<8x128xf32>
    %7 = arith.addf %5, %6 : vector<8x128xf32>
    %c0_5 = arith.constant 0 : index
    %c0_6 = arith.constant 0 : index
    %8 = vector.load %arg4[%c0_5, %c0_6] : memref<8x128xf32, #tpu.memory_space<vmem>>, vector<8x128xf32>
    tpu.vector_store %arg4[%c0_5, %c0_6], %7 {strides = array<i32>} : memref<8x128xf32, #tpu.memory_space<vmem>>, vector<8x128xf32>,
    %c0_i32_7 = arith.constant 0 : i32
    %9 = arith.cmpi eq, %arg1, %c0_i32_7 : i32
    %10 = arith.extui %9 : i1 to i32
    %c0_i32_8 = arith.constant 0 : i32
    %11 = arith.cmpi ne, %10, %c0_i32_8 : i32
    scf.if %11 {
      %c0_9 = arith.constant 0 : index
      %c0_10 = arith.constant 0 : index
      %12 = vector.load %arg4[%c0_9, %c0_10] : memref<8x128xf32, #tpu.memory_space<vmem>>, vector<8x128xf32>
      %cst = arith.constant dense<0.000000e+00> : vector<8xf32>
      %13 = vector.multi_reduction <add>, %12, %cst [1] : vector<8x128xf32> to vector<8xf32>
      %14 = vector.shape_cast %13 : vector<8xf32> to vector<8x1xf32>
      %cst_11 = arith.constant 3.906250e-03 : f32
      %15 = vector.broadcast %cst_11 : f32 to vector<8x1xf32>
      %16 = arith.mulf %14, %15 : vector<8x1xf32>
      %c0_12 = arith.constant 0 : index
      %c0_13 = arith.constant 0 : index
      %17 = vector.load %arg3[%c0_12, %c0_13] : memref<8x1xf32, #tpu.memory_space<vmem>>, vector<8x1xf32>
      tpu.vector_store %arg3[%c0_12, %c0_13], %16 {strides = array<i32>} : memref<8x1xf32, #tpu.memory_space<vmem>>, vector<8x1xf32>,
    } else {
    }
    return
  }
  func.func @transform_0(%arg0: i32, %arg1: i32) -> (i32, i32) {
    %c0_i32 = arith.constant 0 : i32
    return %arg0, %arg1 : i32, i32
  }
  func.func @transform_1(%arg0: i32, %arg1: i32) -> (i32, i32) {
    %c0_i32 = arith.constant 0 : i32
    %c0_i32_0 = arith.constant 0 : i32
    return %arg0, %c0_i32 : i32, i32
  }
}

</mosaic_0001>

<llo_original>
// kernel: tpu_custom_call.1
$region0: #{tpu_custom_call.1}
  #allocation0 [shape = 'u32[]', space=smem, size = 0x4, offset = 0x4, fixed_abs, tag = 'smem constant byte address 0x4 - core index']
  #allocation1 [shape = 'u32[144,128]{1,0:T(1,128)}', space=vmem, size = 0x12000, scoped, tag = 'internal scratch']
  #allocation2 [shape = 'f32[8,128]{1,0:T(8,128)}', space=vmem, size = 0x1000, scoped, tag = 'scratch operand']
  %s0 = inlined_call_operand.hbm [shape: f32[8,256], index: 0, kind: input, shape index: {}]
  %s1 = inlined_call_operand.vmem [shape: f32[8,1], index: 1, kind: output, shape index: {}]
  %s2 = sld [smem:[#allocation0]]
  $region26: #{tpu_custom_call.1} parent=0
    _
  %s4 = ssub.s32 1, %s2
  %s5 = scalar_select 0, %s4, %s2
  $region1: #{tpu_custom_call.1} parent=0
    #allocation3 [shape = 'u8[8192]{0}', space=vmem, size = 0x2000, scoped, tag = 'input window, operand 0, single buffered']
    #allocation4 [shape = 's32[1]{0}', space=sflag, size = 0x4, scoped, tag = 'scoped memory for tpu_custom_call.1']
    %6 = vsyncpa [#allocation4], 0
    // Predicated region
    $region2: #{tpu_custom_call.1} parent=1 // pred_check
      _
    $region3: #{tpu_custom_call.1} parent=1 // pred_check_branch
      %8 = sbr.rel (0) target = $region5
    $region4: #{tpu_custom_call.1} parent=1 // pred_region
      %s10 = ssub.s32 256, 256
      %11 = vsyncadd [#allocation4], %s10
      %s13 = sshll.u32 [#allocation3], 4
      %s14 = int_to_ptr.vmem [resolvable:$true] %s13
      %16 = dma.hbm_to_vmem [thread:$0]  %s0, 256, %s14, [#allocation4]
    $region5: #{tpu_custom_call.1} parent=1 // pred_fallthru
      _
    // Predicated region
    $region6: #{tpu_custom_call.1} parent=1 // pred_check
      _
    $region7: #{tpu_custom_call.1} parent=1 // pred_check_branch
      %18 = sbr.rel (0) target = $region9
    $region8: #{tpu_custom_call.1} parent=1 // pred_region
      %19 = dma.done [#allocation4], 256
    $region9: #{tpu_custom_call.1} parent=1 // pred_fallthru
      _
    %p20 = scmp.eq.s32.totalorder 0, 0
    // Predicated region
    $region10: #{tpu_custom_call.1} parent=1 // pred_check
      %p21 = pneg %p20
    $region11: #{tpu_custom_call.1} parent=1 // pred_check_branch
      %23 = sbr.rel (%p21) target = $region13
    $region12: #{tpu_custom_call.1} parent=1 // pred_region
      %24 = vst [vmem:[#allocation2] sm:$0xff] 0.0
    $region13: #{tpu_custom_call.1} parent=1 // pred_fallthru
      _
    %v25 = vld [vmem:[#allocation2] sm:$0xff]
    %v26 = vld [vmem:[#allocation3] sm:$0xff]
    %v27 = vadd.f32 %v25, %v26
    %v28 = vld [vmem:[#allocation3 + $0x8] sm:$0xff]
    %v29 = vadd.f32 %v27, %v28
    %30 = vst [vmem:[#allocation2] sm:$0xff] %v29
    // Predicated region
    $region14: #{tpu_custom_call.1} parent=1 // pred_check
      %p31 = pneg %p20
    $region15: #{tpu_custom_call.1} parent=1 // pred_check_branch
      %33 = sbr.rel (%p31) target = $region17
    $region16: #{tpu_custom_call.1} parent=1 // pred_region
      %v34 = vld [vmem:[#allocation2] sm:$0xff]
      %35 = vadd.xlane.f32.xlu0 %v34
      %v36 = vpop.xlane.xlu0 %35
      %v37 = vmul.f32 %v36, 0.00390625
      %vm38 = vcmask 7168
      %39 = vst.msk [vmem:[%s1] sm:$0xff] %vm38, %v37
    $region17: #{tpu_custom_call.1} parent=1 // pred_fallthru
      _
    // Predicated region
    $region18: #{tpu_custom_call.1} parent=1 // pred_check
      _
    $region19: #{tpu_custom_call.1} parent=1 // pred_check_branch
      %41 = sbr.rel (0) target = $region21
    $region20: #{tpu_custom_call.1} parent=1 // pred_region
      _
    $region21: #{tpu_custom_call.1} parent=1 // pred_fallthru
      _
    // Predicated region
    $region22: #{tpu_custom_call.1} parent=1 // pred_check
      _
    $region23: #{tpu_custom_call.1} parent=1 // pred_check_branch
      %43 = sbr.rel (0) target = $region25
    $region24: #{tpu_custom_call.1} parent=1 // pred_region
      _
    $region25: #{tpu_custom_call.1} parent=1 // pred_fallthru
      _
    %44 = vsyncpa [#allocation4], 1

</llo_original>
